<compile_context>
chip_gen: v6e
topology: v6e:2x2x1
jax: 0.10.0
libtpu: 0.0.40
codegen_flags: <defaults>
</compile_context>

<pallas_src>
import functools

import jax
import jax.numpy as jnp
from jax.experimental import pallas as pl
from jax.experimental.pallas import tpu as pltpu


def _round_up(x, m):
    return ((x + m - 1) // m) * m


def _vmem_tile_bytes(rows, cols, itemsize):
    # VMEM tiles are laid out in (8, 128) granules regardless of logical shape.
    return _round_up(max(rows, 1), 8) * _round_up(max(cols, 1), 128) * itemsize


def _page_classifier_kernel(x_ref, w_ref, b_ref, o_ref, *, num_labels):
    # x_ref: [TN, E]      page-embedding row tile (pipelined over N)
    # w_ref: [E, Lpad]    linear weight, pre-transposed + zero-padded (resident)
    # b_ref: [1, Lpad]    linear bias, -inf in padded label slots (resident, f32)
    # o_ref: [TN, L]      softmax probabilities over the real labels only
    logits = jnp.dot(x_ref[...], w_ref[...], preferred_element_type=jnp.float32)
    logits = logits + b_ref[...]                     # broadcast [1, Lpad] over rows
    m = jnp.max(logits, axis=-1, keepdims=True)      # numerically stable softmax
    e = jnp.exp(logits - m)                          # exp(-inf - m) == 0 in padded cols
    denom = jnp.sum(e, axis=-1, keepdims=True)
    probs = e / denom                                # exact division: rows sum to 1
    o_ref[...] = probs[:, :num_labels].astype(o_ref.dtype)


def prepare_page_classifier_params(weight, bias, *, param_dtype=jnp.float32):
    """One-time parameter prep (model init, not per forward call).

    weight: [L, E] (torch nn.Linear layout), bias: [L]
    Returns (w_t [E, Lpad], bias_padded [1, Lpad] f32, num_labels).
    """
    l, e = weight.shape
    l_pad = max(128, _round_up(l, 128))
    w_t = jnp.zeros((e, l_pad), dtype=param_dtype).at[:, :l].set(
        weight.T.astype(param_dtype))
    # Padded bias slots are -inf (kept in f32) so exp() of padded logits is
    # exactly 0 and the softmax denominator only sees the real L columns.
    bias_padded = jnp.full((1, l_pad), -jnp.inf, dtype=jnp.float32).at[0, :l].set(
        bias.astype(jnp.float32))
    return w_t, bias_padded, l


def page_classifier_forward(page_embeddings, w_t, bias_padded, num_labels, *,
                            row_tile=2048, xla_fallback_max_rows=0):
    """PageClassifier head (Linear + Softmax over labels) as a Pallas TPU kernel.

    page_embeddings: [N, E] float32 or bfloat16 (use the producer's dtype as-is)
    w_t:             [E, Lpad]   from prepare_page_classifier_params
    bias_padded:     [1, Lpad]   from prepare_page_classifier_params (f32)
    returns:         [N, num_labels] float32 softmax probabilities
    """
    n, e = page_embeddings.shape
    l_pad = w_t.shape[1]
    l = num_labels

    if n <= xla_fallback_max_rows:
        # Tiny-N path: a plain fused XLA op beats kernel-launch overhead.
        logits = jnp.dot(page_embeddings.astype(jnp.float32),
                         w_t[:, :l].astype(jnp.float32)) + bias_padded[0, :l]
        return jax.nn.softmax(logits, axis=-1)

    # Row tile: big (amortize ~0.35us/step overhead) but with >= 2 grid steps
    # whenever possible so the "parallel" axis can shard across TensorCores.
    tn = max(8, min(_round_up(row_tile, 8), _round_up(pl.cdiv(n, 2), 8)))
    grid_steps = pl.cdiv(n, tn)

    # VMEM budget from the real double-buffered footprint (+ margin).
    x_item = jnp.dtype(page_embeddings.dtype).itemsize
    w_item = jnp.dtype(w_t.dtype).itemsize
    footprint = (2 * _vmem_tile_bytes(tn, e, x_item)        # x tiles
                 + 2 * _vmem_tile_bytes(tn, l, 4)            # out tiles
                 + 2 * _vmem_tile_bytes(e, l_pad, w_item)    # resident weight
                 + 2 * _vmem_tile_bytes(1, l_pad, 4))        # resident bias
    vmem_limit = int(min(max(2 * footprint + (4 << 20), 8 << 20), 96 << 20))

    kernel = functools.partial(_page_classifier_kernel, num_labels=l)

    out = pl.pallas_call(
        kernel,
        out_shape=jax.ShapeDtypeStruct((n, l), jnp.float32),
        grid_spec=pl.GridSpec(
            grid=(grid_steps,),
            in_specs=[
                pl.BlockSpec((tn, e), lambda i: (i, 0)),       # pipelined row tiles
                pl.BlockSpec((e, l_pad), lambda i: (0, 0)),    # resident weight
                pl.BlockSpec((1, l_pad), lambda i: (0, 0)),    # resident bias
            ],
            out_specs=pl.BlockSpec((tn, l), lambda i: (i, 0)),  # [N, L] direct
        ),
        compiler_params=pltpu.CompilerParams(
            dimension_semantics=("parallel",),   # megacore shard over N (v7x)
            vmem_limit_bytes=vmem_limit,
        ),
    )(page_embeddings, w_t, bias_padded)
    return out


def _reference(page_embeddings, weight, bias):
    logits = jnp.dot(page_embeddings, weight.T,
                     precision=jax.lax.Precision.HIGHEST) + bias
    return jax.nn.softmax(logits, axis=1)


if __name__ == "__main__":
    # Small, deterministic shapes consistent with the module:
    #   N pages, embedding size E (PageEmbedding.output_size), L = len(Label)
    N, E, L = 8, 32, 4

    key = jax.random.PRNGKey(0)
    k_emb, k_w, k_b, k_emb2 = jax.random.split(key, 4)

    # "PageEmbedding" output, treated as kernel input.
    page_embeddings = jax.random.normal(k_emb, (N, E), dtype=jnp.float32)

    # nn.Linear(E, L) init: U(-1/sqrt(E), 1/sqrt(E)) for weight and bias.
    bound = 1.0 / (E ** 0.5)
    weight = jax.random.uniform(k_w, (L, E), minval=-bound, maxval=bound,
                                dtype=jnp.float32)
    bias = jax.random.uniform(k_b, (L,), minval=-bound, maxval=bound,
                              dtype=jnp.float32)

    # One-time parameter prep (init time, not per forward call).
    w_t, b_pad, num_labels = prepare_page_classifier_params(weight, bias)

    # --- Pallas path, small N (single tile). ---
    out = jax.block_until_ready(
        page_classifier_forward(page_embeddings, w_t, b_pad, num_labels))
    ref = _reference(page_embeddings, weight, bias)
    assert out.shape == (N, L)
    assert jnp.allclose(out, ref, atol=2e-3, rtol=2e-3)
    # Exact division: rows sum to 1 up to f32 rounding.
    assert jnp.allclose(jnp.sum(out, axis=1), jnp.ones((N,)), atol=1e-5)

    # --- Pallas path, multi-tile + ragged last block (N not multiple of TN),
    #     exercising the >=2-step grid used for megacore sharding. ---
    N2 = 520
    emb2 = jax.random.normal(k_emb2, (N2, E), dtype=jnp.float32)
    out2 = jax.block_until_ready(
        page_classifier_forward(emb2, w_t, b_pad, num_labels))
    ref2 = _reference(emb2, weight, bias)
    assert out2.shape == (N2, L)
    assert jnp.allclose(out2, ref2, atol=2e-3, rtol=2e-3)
    assert jnp.allclose(jnp.sum(out2, axis=1), jnp.ones((N2,)), atol=1e-5)

    # --- Tiny-N XLA fallback dispatch check. ---
    out3 = jax.block_until_ready(
        page_classifier_forward(page_embeddings, w_t, b_pad, num_labels,
                                xla_fallback_max_rows=64))
    assert jnp.allclose(out3, ref, atol=2e-3, rtol=2e-3)

    print("KERNEL_OK")
</pallas_src>

<mosaic_0001>
module attributes {stable_mosaic.version = 11 : i64} {
  func.func @_page_classifier_kernel(%arg0: i32, %arg1: memref<8x32xf32, #tpu.memory_space<vmem>>, %arg2: memref<32x128xf32, #tpu.memory_space<vmem>>, %arg3: memref<1x128xf32, #tpu.memory_space<vmem>>, %arg4: memref<8x4xf32, #tpu.memory_space<vmem>>) attributes {dimension_semantics = [#tpu.dimension_semantics<parallel>], iteration_bounds = array<i64: 1>, scalar_prefetch = 0 : i64, scratch_operands = 0 : i64, tpu.core_type = #tpu.core_type<tc>, window_params = [{transform_indices = @transform_0, window_bounds = array<i64: 8, 32>}, {pipeline_mode = #tpu.pipeline_mode<synchronous>, transform_indices = @transform_1, window_bounds = array<i64: 32, 128>}, {pipeline_mode = #tpu.pipeline_mode<synchronous>, transform_indices = @transform_2, window_bounds = array<i64: 1, 128>}, {transform_indices = @transform_3, window_bounds = array<i64: 8, 4>}]} {
    %c0 = arith.constant 0 : index
    %c0_0 = arith.constant 0 : index
    %0 = vector.load %arg1[%c0, %c0_0] : memref<8x32xf32, #tpu.memory_space<vmem>>, vector<8x32xf32>
    %c0_1 = arith.constant 0 : index
    %c0_2 = arith.constant 0 : index
    %1 = vector.load %arg2[%c0_1, %c0_2] : memref<32x128xf32, #tpu.memory_space<vmem>>, vector<32x128xf32>
    %cst = arith.constant dense<0.000000e+00> : vector<8x128xf32>
    %2 = tpu.matmul %0, %1, %cst {dimension_numbers = #tpu.dot_dimension_numbers<[1], [0], [0], [1], [0, 0, 1, 1], [], []>} : vector<8x32xf32>, vector<32x128xf32>, vector<8x128xf32> -> vector<8x128xf32>
    %c0_3 = arith.constant 0 : index
    %c0_4 = arith.constant 0 : index
    %3 = vector.load %arg3[%c0_3, %c0_4] : memref<1x128xf32, #tpu.memory_space<vmem>>, vector<1x128xf32>
    %4 = vector.broadcast %3 : vector<1x128xf32> to vector<8x128xf32>
    %5 = arith.addf %2, %4 : vector<8x128xf32>
    %cst_5 = arith.constant dense<0xFF800000> : vector<8xf32>
    %6 = vector.multi_reduction <maximumf>, %5, %cst_5 [1] : vector<8x128xf32> to vector<8xf32>
    %7 = vector.shape_cast %6 : vector<8xf32> to vector<8x1xf32>
    %8 = vector.broadcast %7 : vector<8x1xf32> to vector<8x128xf32>
    %9 = arith.subf %5, %8 : vector<8x128xf32>
    %10 = math.exp %9 : vector<8x128xf32>
    %cst_6 = arith.constant dense<0.000000e+00> : vector<8xf32>
    %11 = vector.multi_reduction <add>, %10, %cst_6 [1] : vector<8x128xf32> to vector<8xf32>
    %12 = vector.shape_cast %11 : vector<8xf32> to vector<8x1xf32>
    %13 = vector.broadcast %12 : vector<8x1xf32> to vector<8x128xf32>
    %14 = arith.divf %10, %13 : vector<8x128xf32>
    %15 = vector.extract_strided_slice %14 {offsets = [0, 0], sizes = [8, 4], strides = [1, 1]} : vector<8x128xf32> to vector<8x4xf32>
    %c0_7 = arith.constant 0 : index
    %c0_8 = arith.constant 0 : index
    %16 = vector.load %arg4[%c0_7, %c0_8] : memref<8x4xf32, #tpu.memory_space<vmem>>, vector<8x4xf32>
    tpu.vector_store %arg4[%c0_7, %c0_8], %15 {strides = array<i32>} : memref<8x4xf32, #tpu.memory_space<vmem>>, vector<8x4xf32>,
    return
  }
  func.func @transform_0(%arg0: i32) -> (i32, i32) {
    %c0_i32 = arith.constant 0 : i32
    %c0_i32_0 = arith.constant 0 : i32
    return %arg0, %c0_i32 : i32, i32
  }
  func.func @transform_1(%arg0: i32) -> (i32, i32) {
    %c0_i32 = arith.constant 0 : i32
    %c0_i32_0 = arith.constant 0 : i32
    %c0_i32_1 = arith.constant 0 : i32
    return %c0_i32, %c0_i32_0 : i32, i32
  }
  func.func @transform_2(%arg0: i32) -> (i32, i32) {
    %c0_i32 = arith.constant 0 : i32
    %c0_i32_0 = arith.constant 0 : i32
    %c0_i32_1 = arith.constant 0 : i32
    return %c0_i32, %c0_i32_0 : i32, i32
  }
  func.func @transform_3(%arg0: i32) -> (i32, i32) {
    %c0_i32 = arith.constant 0 : i32
    %c0_i32_0 = arith.constant 0 : i32
    return %arg0, %c0_i32 : i32, i32
  }
}

</mosaic_0001>

<llo_original>
// kernel: tpu_custom_call.1
$region0: #{tpu_custom_call.1}
  #allocation0 [shape = 'u32[]', space=smem, size = 0x4, offset = 0x4, fixed_abs, tag = 'smem constant byte address 0x4 - core index']
  #allocation1 [shape = 'u32[144,128]{1,0:T(1,128)}', space=vmem, size = 0x12000, scoped, tag = 'internal scratch']
  %s0 = inlined_call_operand.hbm [shape: f32[8,32], index: 0, kind: input, shape index: {}]
  %s1 = inlined_call_operand.hbm [shape: f32[32,128], index: 1, kind: input, shape index: {}]
  %s2 = inlined_call_operand.vmem [shape: f32[1,128], index: 2, kind: input, shape index: {}]
  %s3 = inlined_call_operand.vmem [shape: f32[8,4], index: 3, kind: output, shape index: {}]
  %s4 = sld [smem:[#allocation0]]
  $region30: #{tpu_custom_call.1} parent=0
    _
  %s6 = ssub.s32 1, %s4
  %s7 = scalar_select 0, %s6, %s4
  $region1: #{tpu_custom_call.1} parent=0
    #allocation2 [shape = 'u8[4096]{0}', space=vmem, size = 0x1000, scoped, tag = 'input window, operand 0, single buffered']
    #allocation3 [shape = 's32[1]{0}', space=sflag, size = 0x4, scoped, tag = 'scoped memory for tpu_custom_call.1']
    #allocation4 [shape = 'u8[16384]{0}', space=vmem, size = 0x4000, scoped, tag = 'input window, operand 1, single buffered']
    #allocation5 [shape = 's32[1]{0}', space=sflag, size = 0x4, scoped, tag = 'scoped memory for tpu_custom_call.1']
    %8 = vsyncpa [#allocation3], 0
    %9 = vsyncpa [#allocation5], 0
    // Predicated region
    $region2: #{tpu_custom_call.1} parent=1 // pred_check
      _
    $region3: #{tpu_custom_call.1} parent=1 // pred_check_branch
      %11 = sbr.rel (0) target = $region5
    $region4: #{tpu_custom_call.1} parent=1 // pred_region
      %s13 = ssub.s32 128, 128
      %14 = vsyncadd [#allocation3], %s13
      %s16 = sshll.u32 [#allocation2], 4
      %s17 = int_to_ptr.vmem [resolvable:$true] %s16
      %19 = dma.hbm_to_vmem [thread:$0]  %s0, 128, %s17, [#allocation3]
    $region5: #{tpu_custom_call.1} parent=1 // pred_fallthru
      _
    // Predicated region
    $region6: #{tpu_custom_call.1} parent=1 // pred_check
      _
    $region7: #{tpu_custom_call.1} parent=1 // pred_check_branch
      %21 = sbr.rel (0) target = $region9
    $region8: #{tpu_custom_call.1} parent=1 // pred_region
      %s23 = ssub.s32 512, 512
      %24 = vsyncadd [#allocation5], %s23
      %s25 = sshll.u32 [#allocation4], 4
      %s26 = int_to_ptr.vmem [resolvable:$true] %s25
      %31 = dma.hbm_to_vmem [thread:$0]  %s1, 512, %s26, [#allocation5], 128, 128, 8
    $region9: #{tpu_custom_call.1} parent=1 // pred_fallthru
      _
    // Predicated region
    $region10: #{tpu_custom_call.1} parent=1 // pred_check
      _
    $region11: #{tpu_custom_call.1} parent=1 // pred_check_branch
      %33 = sbr.rel (0) target = $region13
    $region12: #{tpu_custom_call.1} parent=1 // pred_region
      _
    $region13: #{tpu_custom_call.1} parent=1 // pred_fallthru
      _
    // Predicated region
    $region14: #{tpu_custom_call.1} parent=1 // pred_check
      _
    $region15: #{tpu_custom_call.1} parent=1 // pred_check_branch
      %35 = sbr.rel (0) target = $region17
    $region16: #{tpu_custom_call.1} parent=1 // pred_region
      %36 = dma.done [#allocation3], 128
    $region17: #{tpu_custom_call.1} parent=1 // pred_fallthru
      _
    // Predicated region
    $region18: #{tpu_custom_call.1} parent=1 // pred_check
      _
    $region19: #{tpu_custom_call.1} parent=1 // pred_check_branch
      %38 = sbr.rel (0) target = $region21
    $region20: #{tpu_custom_call.1} parent=1 // pred_region
      %39 = dma.done [#allocation5], 512
    $region21: #{tpu_custom_call.1} parent=1 // pred_fallthru
      _
    %v40 = vld [vmem:[#allocation2] sm:$0xff]
    %v41 = vld [vmem:[#allocation4] sm:$0xff]
    %v42 = vld [vmem:[#allocation4 + $0x8] sm:$0xff]
    %v43 = vld [vmem:[#allocation4 + $0x10] sm:$0xff]
    %v44 = vld [vmem:[#allocation4 + $0x18] sm:$0xff]
    %v45 = vld [vmem:[%s2] sm:$0x1]
    %v47 = vlaneseq
    %v48 = vshrl.u32 %v47, 7
    %v49 = vsub.s32 0, %v48
    %v50 = vrot.slane %v45, %v49
    %vm52 = vcmask 261120
    %v54 = vsel %vm52, %v40, 0
    %56 = vmatprep.subr.mxu0 0.0
    %57 = vmatpush1.msra.mxu0 0.0
    %58 = vmatprep.subr.mxu0 0.0
    %59 = vmatpush1.msra.mxu0 0.0
    %60 = vmatprep.subr.mxu0 0.0
    %61 = vmatpush1.msra.mxu0 0.0
    %62 = vmatprep.subr.mxu0 0.0
    %63 = vmatpush1.msra.mxu0 0.0
    %64 = vmatprep.subr.mxu0 0.0
    %65 = vmatpush1.msra.mxu0 0.0
    %66 = vmatprep.subr.mxu0 0.0
    %67 = vmatpush1.msra.mxu0 0.0
    %68 = vmatprep.subr.mxu0 0.0
    %69 = vmatpush1.msra.mxu0 0.0
    %70 = vmatprep.subr.mxu0 0.0
    %71 = vmatpush1.msra.mxu0 0.0
    %72 = vmatprep.subr.mxu0 0.0
    %73 = vmatpush1.msra.mxu0 0.0
    %74 = vmatprep.subr.mxu0 0.0
    %75 = vmatpush1.msra.mxu0 0.0
    %76 = vmatprep.subr.mxu0 0.0
    %77 = vmatpush1.msra.mxu0 0.0
    %78 = vmatprep.subr.mxu0 0.0
    %79 = vmatpush1.msra.mxu0 0.0
    %80 = vmatprep.subr.mxu0 0.0
    %81 = vmatpush1.msra.mxu0 %v44
    %82 = vmatprep.subr.mxu0 0.0
    %83 = vmatpush1.msra.mxu0 %v43
    %84 = vmatprep.subr.mxu0 0.0
    %85 = vmatpush1.msra.mxu0 %v42
    %86 = vmatprep.subr.mxu0 0.0
    %87 = vmatpush1.msra.mxu0 %v41
    %88 = vmatprep.subr.mxu0 0.0
    %89 = vmatpush2.msra.mxu0 0.0
    %90 = vmatprep.subr.mxu0 0.0
    %91 = vmatpush2.msra.mxu0 0.0
    %92 = vmatprep.subr.mxu0 0.0
    %93 = vmatpush2.msra.mxu0 0.0
    %94 = vmatprep.subr.mxu0 0.0
    %95 = vmatpush2.msra.mxu0 0.0
    %96 = vmatprep.subr.mxu0 0.0
    %97 = vmatpush2.msra.mxu0 0.0
    %98 = vmatprep.subr.mxu0 0.0
    %99 = vmatpush2.msra.mxu0 0.0
    %100 = vmatprep.subr.mxu0 0.0
    %101 = vmatpush2.msra.mxu0 0.0
    %102 = vmatprep.subr.mxu0 0.0
    %103 = vmatpush2.msra.mxu0 0.0
    %104 = vmatprep.subr.mxu0 0.0
    %105 = vmatpush2.msra.mxu0 0.0
    %106 = vmatprep.subr.mxu0 0.0
    %107 = vmatpush2.msra.mxu0 0.0
    %108 = vmatprep.subr.mxu0 0.0
    %109 = vmatpush2.msra.mxu0 0.0
    %110 = vmatprep.subr.mxu0 0.0
    %111 = vmatpush2.msra.mxu0 0.0
    %112 = vmatprep.subr.mxu0 0.0
    %113 = vmatpush2.msra.mxu0 0.0
    %114 = vmatprep.subr.mxu0 0.0
    %115 = vmatpush2.msra.mxu0 0.0
    %116 = vmatprep.subr.mxu0 0.0
    %117 = vmatpush2.msra.mxu0 0.0
    %118 = vmatprep.subr.mxu0 0.0
    %119 = vmatpush2.msra.mxu0 0.0
    %120 = vmatprep.mubr.f32.mxu0 0.0
    %121 = vmatmul.mubr.f32.gmra.mxu0 %v54
    %v122 = vpop.f32.mrf.mxu0
    %v123 = vadd.f32 %v50, %v122
    %v124 = vpop.f32.mrf.mxu0
    %125 = vdwg.mxu0
    %126 = vmax.xlane.f32.xlu0 %v123
    %v127 = vpop.xlane.xlu0 %126
    %v128 = vsub.f32 %v123, %v127
    %v129 = vmul.f32 %v128, 1.442695
    %v130 = vpow.pop %v129
    %131 = vadd.xlane.f32.xlu0 %v130
    %v132 = vpop.xlane.xlu0 %131
    %v133 = vrcp.pop %v132
    %v134 = vmul.f32 %v130, %v133
    %vm135 = vcmask 31744
    %136 = vst.msk [vmem:[%s3] sm:$0xff] %vm135, %v134
    // Predicated region
    $region22: #{tpu_custom_call.1} parent=1 // pred_check
      _
    $region23: #{tpu_custom_call.1} parent=1 // pred_check_branch
      %138 = sbr.rel (0) target = $region25
    $region24: #{tpu_custom_call.1} parent=1 // pred_region
      _
    $region25: #{tpu_custom_call.1} parent=1 // pred_fallthru
      _
    // Predicated region
    $region26: #{tpu_custom_call.1} parent=1 // pred_check
      _
    $region27: #{tpu_custom_call.1} parent=1 // pred_check_branch
      %140 = sbr.rel (0) target = $region29
    $region28: #{tpu_custom_call.1} parent=1 // pred_region
      _
    $region29: #{tpu_custom_call.1} parent=1 // pred_fallthru
      _
    %141 = vsyncpa [#allocation3], 1
    %142 = vsyncpa [#allocation5], 1

</llo_original>
